<compile_context>
chip_gen: v5e
topology: v5e:2x2
jax: 0.10.0
libtpu: 0.0.40
codegen_flags: <defaults>
</compile_context>

<pallas_src>
import functools

import jax
import jax.numpy as jnp
from jax.experimental import pallas as pl
from jax.experimental.pallas import tpu as pltpu


# ----------------------------- Pallas kernel ------------------------------ #

def _ttlmlp_kernel(x_ref, w1_ref, b1_ref, wv_ref, bv_ref, wg_ref, bg_ref,
                   w2_ref, b2_ref, gamma_ref, o_ref, *, eps):
    """Fused fc1 -> SwiGLU -> fc2 -> residual add -> RMSNorm for one row tile."""
    x = x_ref[...]                                                   # (TR, D) f32
    xb = x.astype(jnp.bfloat16)

    # fc1: TT-linear (dense-equivalent).  bf16 MXU matmul, f32 accumulate.
    h = jnp.dot(xb, w1_ref[...], preferred_element_type=jnp.float32) + b1_ref[...]
    hb = h.astype(jnp.bfloat16)

    # SwiGLU: two lane-aligned dots (val / gate); gating stays in f32.
    val = jnp.dot(hb, wv_ref[...], preferred_element_type=jnp.float32) + bv_ref[...]
    gate = jnp.dot(hb, wg_ref[...], preferred_element_type=jnp.float32) + bg_ref[...]
    a = val * (gate * jax.nn.sigmoid(gate))                          # (TR, H) f32

    # fc2: TT-linear (dense-equivalent).
    y = jnp.dot(a.astype(jnp.bfloat16), w2_ref[...],
                preferred_element_type=jnp.float32) + b2_ref[...]    # (TR, D) f32

    # residual + RMSNorm (all f32).
    y = y + x
    ms = jnp.mean(y * y, axis=-1, keepdims=True)
    o_ref[...] = (y * jax.lax.rsqrt(ms + eps)) * gamma_ref[...]


def _as_bf16(w):
    # Weights should already be bf16 (cast once at init); this is a no-op then.
    return w if w.dtype == jnp.bfloat16 else w.astype(jnp.bfloat16)


def ttlmlp_forward(x, params, *, row_tile=256, eps=1e-6):
    """x: (B, S, D) float32.  Returns (B, S, D) float32."""
    B, S, D = x.shape
    H = params["w1"].shape[1]
    n_rows = B * S
    x_flat = x.reshape(n_rows, D)

    # Row tile: sublane-aligned (multiple of 8); keep >= 2 grid steps whenever
    # the row count allows so the "parallel" axis shards across both v7x TCs.
    rt = min(row_tile, n_rows)
    if n_rows >= 16 and rt > (n_rows + 1) // 2:
        rt = (n_rows + 1) // 2
    rt = max(8, (rt // 8) * 8)
    n_blocks = pl.cdiv(n_rows, rt)     # ragged last block handled by Pallas

    # bf16 weights (resident, single-buffered); biases / gamma stay f32.
    w1 = _as_bf16(params["w1"])
    wv = _as_bf16(params["wp_val"])
    wg = _as_bf16(params["wp_gate"])
    w2 = _as_bf16(params["w2"])

    kernel = functools.partial(_ttlmlp_kernel, eps=eps)
    const = lambda i: (0, 0)           # constant (full) block every grid step

    def wspec(shape):
        # Constant blocks -> single buffer (no pointless double-buffering).
        return pl.BlockSpec(shape, const, pipeline_mode=pl.Buffered(1))

    # Explicit scoped-VMEM budget: resident weights + double-buffered in/out
    # tiles + live f32 intermediates, with headroom; clamp to 64 MiB (v7x/TC).
    weight_bytes = (D * H + 2 * H * H + H * D) * 2 + (3 * H + 2 * D) * 4
    io_bytes = 2 * 2 * rt * D * 4                  # double-buffered x in + out (f32)
    interm_bytes = 4 * rt * H * 4                  # h, val, gate, a (f32)
    vmem_limit = int(1.5 * (weight_bytes + io_bytes + interm_bytes)) + (8 << 20)
    vmem_limit = max(16 << 20, min(vmem_limit, 64 << 20))

    # Advisory cost hint for the XLA scheduler.
    flops = 2 * n_rows * (D * H + 2 * H * H + H * D)
    bytes_accessed = (2 * n_rows * D * 4           # x in + out (f32)
                      + weight_bytes)
    transcendentals = n_rows * (H + 1)             # sigmoid + rsqrt

    out_flat = pl.pallas_call(
        kernel,
        out_shape=jax.ShapeDtypeStruct((n_rows, D), jnp.float32),
        grid=(n_blocks,),
        in_specs=[
            pl.BlockSpec((rt, D), lambda i: (i, 0)),   # x rows (double-buffered)
            wspec((D, H)),                             # w1  (bf16, resident)
            wspec((1, H)),                             # b1
            wspec((H, H)),                             # wp_val  (bf16, resident)
            wspec((1, H)),                             # bp_val
            wspec((H, H)),                             # wp_gate (bf16, resident)
            wspec((1, H)),                             # bp_gate
            wspec((H, D)),                             # w2  (bf16, resident)
            wspec((1, D)),                             # b2
            wspec((1, D)),                             # gamma (RMSNorm)
        ],
        out_specs=pl.BlockSpec((rt, D), lambda i: (i, 0)),
        compiler_params=pltpu.CompilerParams(
            dimension_semantics=("parallel",),
            vmem_limit_bytes=vmem_limit),
        cost_estimate=pl.CostEstimate(flops=flops,
                                      transcendentals=transcendentals,
                                      bytes_accessed=bytes_accessed),
    )(x_flat, w1, params["b1"], wv, params["bp_val"], wg, params["bp_gate"],
      w2, params["b2"], params["gamma"])

    return out_flat.reshape(B, S, D)


# --------------------------- parameter building --------------------------- #

def _tt_dense_weight(key, in_modes, out_modes, rank):
    """Materialize a dense (prod(in_modes), prod(out_modes)) weight from 2 TT cores.

    cores: G1 [i1, o1, r], G2 [r, i2, o2];
    W[(i1,i2),(o1,o2)] = sum_r G1[i1,o1,r] * G2[r,i2,o2]
    """
    k1, k2 = jax.random.split(key)
    fan_in = in_modes[0] * in_modes[1]
    scale = (1.0 / fan_in) ** 0.5 / rank ** 0.5
    g1 = jax.random.normal(k1, (in_modes[0], out_modes[0], rank), jnp.float32) * scale
    g2 = jax.random.normal(k2, (rank, in_modes[1], out_modes[1]), jnp.float32) * scale
    w = jnp.einsum("aor,rbp->abop", g1, g2)          # [i1, i2, o1, o2]
    return w.reshape(in_modes[0] * in_modes[1], out_modes[0] * out_modes[1])


def make_ttlmlp_params(key, dim, expanse_factor, tt_rank=2):
    """Matmul weights are stored in bf16 once here (no per-call cast)."""
    H = expanse_factor * dim
    bf = jnp.bfloat16
    ks = jax.random.split(key, 6)
    # fc1: TTLinear(dim, H)
    w1 = _tt_dense_weight(ks[0], (4, dim // 4), (8, H // 8), tt_rank).astype(bf)
    b1 = jnp.zeros((1, H), jnp.float32)
    # SwiGLU projection on the hidden width, stored pre-split (val / gate).
    scale = (1.0 / H) ** 0.5
    wp_val = (jax.random.normal(ks[1], (H, H), jnp.float32) * scale).astype(bf)
    wp_gate = (jax.random.normal(ks[2], (H, H), jnp.float32) * scale).astype(bf)
    bp_val = jnp.zeros((1, H), jnp.float32)
    bp_gate = jnp.zeros((1, H), jnp.float32)
    # fc2: TTLinear(H, dim)
    w2 = _tt_dense_weight(ks[3], (8, H // 8), (4, dim // 4), tt_rank).astype(bf)
    b2 = jnp.zeros((1, dim), jnp.float32)
    # RMSNorm gain
    gamma = jnp.ones((1, dim), jnp.float32)
    return dict(w1=w1, b1=b1, wp_val=wp_val, bp_val=bp_val,
                wp_gate=wp_gate, bp_gate=bp_gate, w2=w2, b2=b2, gamma=gamma)


# ------------------------------- reference -------------------------------- #

def ttlmlp_reference(x, params, eps=1e-6):
    f32 = lambda a: a.astype(jnp.float32)
    h = x @ f32(params["w1"]) + params["b1"]
    val = h @ f32(params["wp_val"]) + params["bp_val"]
    gate = h @ f32(params["wp_gate"]) + params["bp_gate"]
    a = val * (gate * jax.nn.sigmoid(gate))
    y = a @ f32(params["w2"]) + params["b2"] + x
    ms = jnp.mean(y * y, axis=-1, keepdims=True)
    return y * jax.lax.rsqrt(ms + eps) * params["gamma"]


# --------------------------------- main ------------------------------------ #

if __name__ == "__main__":
    dim = 32
    expanse_factor = 2
    B, S = 2, 8

    key = jax.random.PRNGKey(0)
    k_x, k_p = jax.random.split(key)
    x = jax.random.normal(k_x, (B, S, dim), jnp.float32)
    params = make_ttlmlp_params(k_p, dim, expanse_factor)

    out = ttlmlp_forward(x, params)
    out = jax.block_until_ready(out)

    ref = ttlmlp_reference(x, params)
    assert out.shape == (B, S, dim), out.shape
    # bf16 matmuls / bf16 hidden activations with f32 accumulation: loose tolerance.
    assert jnp.allclose(out, ref, atol=5e-2, rtol=5e-2), "mismatch vs reference"

    print("KERNEL_OK")
</pallas_src>

<mosaic_0001>
module attributes {stable_mosaic.version = 11 : i64} {
  func.func @_ttlmlp_kernel(%arg0: i32, %arg1: memref<8x32xf32, #tpu.memory_space<vmem>>, %arg2: memref<32x64xbf16, #tpu.memory_space<vmem>>, %arg3: memref<1x64xf32, #tpu.memory_space<vmem>>, %arg4: memref<64x64xbf16, #tpu.memory_space<vmem>>, %arg5: memref<1x64xf32, #tpu.memory_space<vmem>>, %arg6: memref<64x64xbf16, #tpu.memory_space<vmem>>, %arg7: memref<1x64xf32, #tpu.memory_space<vmem>>, %arg8: memref<64x32xbf16, #tpu.memory_space<vmem>>, %arg9: memref<1x32xf32, #tpu.memory_space<vmem>>, %arg10: memref<1x32xf32, #tpu.memory_space<vmem>>, %arg11: memref<8x32xf32, #tpu.memory_space<vmem>>) attributes {dimension_semantics = [#tpu.dimension_semantics<parallel>], iteration_bounds = array<i64: 2>, scalar_prefetch = 0 : i64, scratch_operands = 0 : i64, tpu.core_type = #tpu.core_type<tc>, window_params = [{transform_indices = @transform_0, window_bounds = array<i64: 8, 32>}, {pipeline_mode = #tpu.pipeline_mode<synchronous>, transform_indices = @transform_1, window_bounds = array<i64: 32, 64>}, {pipeline_mode = #tpu.pipeline_mode<synchronous>, transform_indices = @transform_2, window_bounds = array<i64: 1, 64>}, {pipeline_mode = #tpu.pipeline_mode<synchronous>, transform_indices = @transform_3, window_bounds = array<i64: 64, 64>}, {pipeline_mode = #tpu.pipeline_mode<synchronous>, transform_indices = @transform_4, window_bounds = array<i64: 1, 64>}, {pipeline_mode = #tpu.pipeline_mode<synchronous>, transform_indices = @transform_5, window_bounds = array<i64: 64, 64>}, {pipeline_mode = #tpu.pipeline_mode<synchronous>, transform_indices = @transform_6, window_bounds = array<i64: 1, 64>}, {pipeline_mode = #tpu.pipeline_mode<synchronous>, transform_indices = @transform_7, window_bounds = array<i64: 64, 32>}, {pipeline_mode = #tpu.pipeline_mode<synchronous>, transform_indices = @transform_8, window_bounds = array<i64: 1, 32>}, {pipeline_mode = #tpu.pipeline_mode<synchronous>, transform_indices = @transform_9, window_bounds = array<i64: 1, 32>}, {transform_indices = @transform_10, window_bounds = array<i64: 8, 32>}]} {
    %c0 = arith.constant 0 : index
    %c0_0 = arith.constant 0 : index
    %0 = vector.load %arg1[%c0, %c0_0] : memref<8x32xf32, #tpu.memory_space<vmem>>, vector<8x32xf32>
    %1 = arith.truncf %0 : vector<8x32xf32> to vector<8x32xbf16>
    %c0_1 = arith.constant 0 : index
    %c0_2 = arith.constant 0 : index
    %2 = vector.load %arg2[%c0_1, %c0_2] : memref<32x64xbf16, #tpu.memory_space<vmem>>, vector<32x64xbf16>
    %cst = arith.constant dense<0.000000e+00> : vector<8x64xf32>
    %3 = tpu.matmul %1, %2, %cst {dimension_numbers = #tpu.dot_dimension_numbers<[1], [0], [0], [1], [0, 0, 1, 1], [], []>} : vector<8x32xbf16>, vector<32x64xbf16>, vector<8x64xf32> -> vector<8x64xf32>
    %c0_3 = arith.constant 0 : index
    %c0_4 = arith.constant 0 : index
    %4 = vector.load %arg3[%c0_3, %c0_4] : memref<1x64xf32, #tpu.memory_space<vmem>>, vector<1x64xf32>
    %5 = vector.broadcast %4 : vector<1x64xf32> to vector<8x64xf32>
    %6 = arith.addf %3, %5 : vector<8x64xf32>
    %7 = arith.truncf %6 : vector<8x64xf32> to vector<8x64xbf16>
    %c0_5 = arith.constant 0 : index
    %c0_6 = arith.constant 0 : index
    %8 = vector.load %arg4[%c0_5, %c0_6] : memref<64x64xbf16, #tpu.memory_space<vmem>>, vector<64x64xbf16>
    %cst_7 = arith.constant dense<0.000000e+00> : vector<8x64xf32>
    %9 = tpu.matmul %7, %8, %cst_7 {dimension_numbers = #tpu.dot_dimension_numbers<[1], [0], [0], [1], [0, 0, 1, 1], [], []>} : vector<8x64xbf16>, vector<64x64xbf16>, vector<8x64xf32> -> vector<8x64xf32>
    %c0_8 = arith.constant 0 : index
    %c0_9 = arith.constant 0 : index
    %10 = vector.load %arg5[%c0_8, %c0_9] : memref<1x64xf32, #tpu.memory_space<vmem>>, vector<1x64xf32>
    %11 = vector.broadcast %10 : vector<1x64xf32> to vector<8x64xf32>
    %12 = arith.addf %9, %11 : vector<8x64xf32>
    %c0_10 = arith.constant 0 : index
    %c0_11 = arith.constant 0 : index
    %13 = vector.load %arg6[%c0_10, %c0_11] : memref<64x64xbf16, #tpu.memory_space<vmem>>, vector<64x64xbf16>
    %cst_12 = arith.constant dense<0.000000e+00> : vector<8x64xf32>
    %14 = tpu.matmul %7, %13, %cst_12 {dimension_numbers = #tpu.dot_dimension_numbers<[1], [0], [0], [1], [0, 0, 1, 1], [], []>} : vector<8x64xbf16>, vector<64x64xbf16>, vector<8x64xf32> -> vector<8x64xf32>
    %c0_13 = arith.constant 0 : index
    %c0_14 = arith.constant 0 : index
    %15 = vector.load %arg7[%c0_13, %c0_14] : memref<1x64xf32, #tpu.memory_space<vmem>>, vector<1x64xf32>
    %16 = vector.broadcast %15 : vector<1x64xf32> to vector<8x64xf32>
    %17 = arith.addf %14, %16 : vector<8x64xf32>
    %18 = arith.negf %17 : vector<8x64xf32>
    %19 = math.exp %18 : vector<8x64xf32>
    %cst_15 = arith.constant 1.000000e+00 : f32
    %20 = vector.broadcast %cst_15 : f32 to vector<8x64xf32>
    %21 = arith.addf %20, %19 : vector<8x64xf32>
    %22 = arith.divf %20, %21 : vector<8x64xf32>
    %23 = arith.mulf %17, %22 : vector<8x64xf32>
    %24 = arith.mulf %12, %23 : vector<8x64xf32>
    %25 = arith.truncf %24 : vector<8x64xf32> to vector<8x64xbf16>
    %c0_16 = arith.constant 0 : index
    %c0_17 = arith.constant 0 : index
    %26 = vector.load %arg8[%c0_16, %c0_17] : memref<64x32xbf16, #tpu.memory_space<vmem>>, vector<64x32xbf16>
    %cst_18 = arith.constant dense<0.000000e+00> : vector<8x32xf32>
    %27 = tpu.matmul %25, %26, %cst_18 {dimension_numbers = #tpu.dot_dimension_numbers<[1], [0], [0], [1], [0, 0, 1, 1], [], []>} : vector<8x64xbf16>, vector<64x32xbf16>, vector<8x32xf32> -> vector<8x32xf32>
    %c0_19 = arith.constant 0 : index
    %c0_20 = arith.constant 0 : index
    %28 = vector.load %arg9[%c0_19, %c0_20] : memref<1x32xf32, #tpu.memory_space<vmem>>, vector<1x32xf32>
    %29 = vector.broadcast %28 : vector<1x32xf32> to vector<8x32xf32>
    %30 = arith.addf %27, %29 : vector<8x32xf32>
    %31 = arith.addf %30, %0 : vector<8x32xf32>
    %32 = arith.mulf %31, %31 : vector<8x32xf32>
    %cst_21 = arith.constant dense<0.000000e+00> : vector<8xf32>
    %33 = vector.multi_reduction <add>, %32, %cst_21 [1] : vector<8x32xf32> to vector<8xf32>
    %34 = vector.shape_cast %33 : vector<8xf32> to vector<8x1xf32>
    %cst_22 = arith.constant 3.200000e+01 : f32
    %35 = vector.broadcast %cst_22 : f32 to vector<8x1xf32>
    %36 = arith.divf %34, %35 : vector<8x1xf32>
    %cst_23 = arith.constant 9.99999997E-7 : f32
    %37 = vector.broadcast %cst_23 : f32 to vector<8x1xf32>
    %38 = arith.addf %36, %37 : vector<8x1xf32>
    %39 = math.rsqrt %38 : vector<8x1xf32>
    %40 = vector.broadcast %39 : vector<8x1xf32> to vector<8x32xf32>
    %41 = arith.mulf %31, %40 : vector<8x32xf32>
    %c0_24 = arith.constant 0 : index
    %c0_25 = arith.constant 0 : index
    %42 = vector.load %arg10[%c0_24, %c0_25] : memref<1x32xf32, #tpu.memory_space<vmem>>, vector<1x32xf32>
    %43 = vector.broadcast %42 : vector<1x32xf32> to vector<8x32xf32>
    %44 = arith.mulf %41, %43 : vector<8x32xf32>
    %c0_26 = arith.constant 0 : index
    %c0_27 = arith.constant 0 : index
    %45 = vector.load %arg11[%c0_26, %c0_27] : memref<8x32xf32, #tpu.memory_space<vmem>>, vector<8x32xf32>
    tpu.vector_store %arg11[%c0_26, %c0_27], %44 {strides = array<i32>} : memref<8x32xf32, #tpu.memory_space<vmem>>, vector<8x32xf32>,
    return
  }
  func.func @transform_0(%arg0: i32) -> (i32, i32) {
    %c0_i32 = arith.constant 0 : i32
    %c0_i32_0 = arith.constant 0 : i32
    return %arg0, %c0_i32 : i32, i32
  }
  func.func @transform_1(%arg0: i32) -> (i32, i32) {
    %c0_i32 = arith.constant 0 : i32
    %c0_i32_0 = arith.constant 0 : i32
    %c0_i32_1 = arith.constant 0 : i32
    return %c0_i32, %c0_i32_0 : i32, i32
  }
  func.func @transform_2(%arg0: i32) -> (i32, i32) {
    %c0_i32 = arith.constant 0 : i32
    %c0_i32_0 = arith.constant 0 : i32
    %c0_i32_1 = arith.constant 0 : i32
    return %c0_i32, %c0_i32_0 : i32, i32
  }
  func.func @transform_3(%arg0: i32) -> (i32, i32) {
    %c0_i32 = arith.constant 0 : i32
    %c0_i32_0 = arith.constant 0 : i32
    %c0_i32_1 = arith.constant 0 : i32
    return %c0_i32, %c0_i32_0 : i32, i32
  }
  func.func @transform_4(%arg0: i32) -> (i32, i32) {
    %c0_i32 = arith.constant 0 : i32
    %c0_i32_0 = arith.constant 0 : i32
    %c0_i32_1 = arith.constant 0 : i32
    return %c0_i32, %c0_i32_0 : i32, i32
  }
  func.func @transform_5(%arg0: i32) -> (i32, i32) {
    %c0_i32 = arith.constant 0 : i32
    %c0_i32_0 = arith.constant 0 : i32
    %c0_i32_1 = arith.constant 0 : i32
    return %c0_i32, %c0_i32_0 : i32, i32
  }
  func.func @transform_6(%arg0: i32) -> (i32, i32) {
    %c0_i32 = arith.constant 0 : i32
    %c0_i32_0 = arith.constant 0 : i32
    %c0_i32_1 = arith.constant 0 : i32
    return %c0_i32, %c0_i32_0 : i32, i32
  }
  func.func @transform_7(%arg0: i32) -> (i32, i32) {
    %c0_i32 = arith.constant 0 : i32
    %c0_i32_0 = arith.constant 0 : i32
    %c0_i32_1 = arith.constant 0 : i32
    return %c0_i32, %c0_i32_0 : i32, i32
  }
  func.func @transform_8(%arg0: i32) -> (i32, i32) {
    %c0_i32 = arith.constant 0 : i32
    %c0_i32_0 = arith.constant 0 : i32
    %c0_i32_1 = arith.constant 0 : i32
    return %c0_i32, %c0_i32_0 : i32, i32
  }
  func.func @transform_9(%arg0: i32) -> (i32, i32) {
    %c0_i32 = arith.constant 0 : i32
    %c0_i32_0 = arith.constant 0 : i32
    %c0_i32_1 = arith.constant 0 : i32
    return %c0_i32, %c0_i32_0 : i32, i32
  }
  func.func @transform_10(%arg0: i32) -> (i32, i32) {
    %c0_i32 = arith.constant 0 : i32
    %c0_i32_0 = arith.constant 0 : i32
    return %arg0, %c0_i32 : i32, i32
  }
}

</mosaic_0001>

<llo_original>
// kernel: tpu_custom_call.1
$region0: #{tpu_custom_call.1}
  #allocation0 [shape = 'u32[]', space=smem, size = 0x4, offset = 0x4, fixed_abs, tag = 'smem constant byte address 0x4 - core index']
  #allocation1 [shape = 'u32[72,128]{1,0:T(1,128)}', space=vmem, size = 0x9000, scoped, tag = 'internal scratch']
  %s0 = inlined_call_operand.vmem [shape: f32[16,32], index: 0, kind: input, shape index: {}]
  %s1 = inlined_call_operand.hbm [shape: bf16[32,64], index: 1, kind: input, shape index: {}]
  %s2 = inlined_call_operand.vmem [shape: f32[1,64], index: 2, kind: input, shape index: {}]
  %s3 = inlined_call_operand.vmem [shape: bf16[64,64], index: 3, kind: input, shape index: {}]
  %s4 = inlined_call_operand.vmem [shape: f32[1,64], index: 4, kind: input, shape index: {}]
  %s5 = inlined_call_operand.hbm [shape: bf16[64,64], index: 5, kind: input, shape index: {}]
  %s6 = inlined_call_operand.vmem [shape: f32[1,64], index: 6, kind: input, shape index: {}]
  %s7 = inlined_call_operand.vmem [shape: bf16[64,32], index: 7, kind: input, shape index: {}]
  %s8 = inlined_call_operand.vmem [shape: f32[1,32], index: 8, kind: input, shape index: {}]
  %s9 = inlined_call_operand.vmem [shape: f32[1,32], index: 9, kind: input, shape index: {}]
  %s10 = inlined_call_operand.hbm [shape: f32[16,32], index: 10, kind: output, shape index: {}]
  %s11 = sld [smem:[#allocation0]]
  $region81: #{tpu_custom_call.1} parent=0
    _
  %s13 = ssub.s32 1, %s11
  %s14 = scalar_select 0, %s13, %s11
  $region1: #{tpu_custom_call.1} parent=0
    #allocation2 [shape = 'u8[8192]{0}', space=vmem, size = 0x2000, scoped, tag = 'input window, operand 1, single buffered']
    #allocation3 [shape = 's32[2]{0}', space=sflag, size = 0x8, scoped, tag = 'scoped memory for tpu_custom_call.1']
    #allocation4 [shape = 's32[2]{0}', space=sflag, size = 0x8, scoped, tag = 'scoped memory for tpu_custom_call.1']
    #allocation5 [shape = 'u8[16384]{0}', space=vmem, size = 0x4000, scoped, tag = 'input window, operand 5, single buffered']
    #allocation6 [shape = 's32[1]{0}', space=sflag, size = 0x4, scoped, tag = 'scoped memory for tpu_custom_call.1']
    #allocation7 [shape = 'u8[8192]{0}', space=vmem, size = 0x2000, scoped, tag = 'output window, operand 0']
    %15 = vsyncpa [#allocation3], 0
    %16 = vsyncpa [#allocation6], 0
    %17 = vsyncpa [#allocation4], 0
    %s18 = scalar_lea.sflag [#allocation4], 1
    %19 = vsyncpa %s18, 0
    loop: start=0, step=1, limit=4
    $region2: #{tpu_custom_call.1} parent=1 // loop_pre_header
      _
    $region3: #{tpu_custom_call.1} parent=1 // loop_header
      %s21 = sphi 0, %s25
      %p22 = scmp.ge.s32.totalorder %s21, 4
      %s31 = sphi 0, %s33
      %s34 = sphi 0, %s31
      %s35 = sphi 0, %s34
      %s51 = sphi 0, %s35
      %s55 = sphi 0, %s55
      %s57 = sphi 0, %s55
      %s58 = sphi 0, %s57
      %s72 = sphi 0, %s58
      %s76 = sphi 0, %s76
      %s78 = sphi 0, %s76
      %s79 = sphi 0, %s78
      %s93 = sphi 0, %s79
      %s97 = sphi 0, %s97
      %s99 = sphi 0, %s97
      %s100 = sphi 0, %s99
      %s114 = sphi 0, %s100
      %s118 = sphi 0, %s118
      %s120 = sphi 0, %s118
      %s121 = sphi 0, %s120
      %s135 = sphi 0, %s121
      %s139 = sphi 0, %s139
      %s141 = sphi 0, %s139
      %s142 = sphi 0, %s141
      %s156 = sphi 0, %s142
      %s160 = sphi 0, %s160
      %s162 = sphi 0, %s160
      %s163 = sphi 0, %s162
      %s177 = sphi 0, %s163
      %s181 = sphi 0, %s181
      %s183 = sphi 0, %s181
      %s184 = sphi 0, %s183
      %s198 = sphi 0, %s184
      %s202 = sphi 0, %s202
      %s204 = sphi 0, %s202
      %s205 = sphi 0, %s204
      %s219 = sphi 0, %s205
      %s223 = sphi 0, %s223
      %s225 = sphi 0, %s223
      %s226 = sphi 0, %s225
      %s240 = sphi 0, %s226
      %s246 = sphi 0, %s248
      %s249 = sphi 0, %s246
      %s250 = sphi 0, %s249
      %s266 = sphi 0, %s250
    $region4: #{tpu_custom_call.1} parent=1 // loop_header_branch
      %24 = sbr.rel (%p22) target = $region8
    $region5: #{tpu_custom_call.1} parent=1 // loop_body
      %s26 = ssub.s32 %s21, 1
      %s27 = ssub.s32 %s21, 2
      %s28 = sadd.s32 %s21, 1
      %s29 = ssub.s32 %s21, %s28
      %p30 = scmp.eq.s32.totalorder %s29, 0
      %s32 = sadd.s32 %s31, 1
      %s33 = scalar_select %p30, %s31, %s32
      %p36 = pneg %p30
      %p37 = scmp.eq.s32.totalorder %s21, 1
      %p38 = por %p36, %p37
      %p39 = scmp.ne.s32.totalorder %s31, %s34
      %p40 = scmp.eq.s32.totalorder %s21, 0
      %p41 = por %p39, %p40
      %p42 = scmp.ne.s32.totalorder %s31, %s34
      %p43 = scmp.eq.s32.totalorder %s26, 1
      %p44 = por %p42, %p43
      %p45 = scmp.ne.s32.totalorder %s34, %s35
      %p46 = scmp.eq.s32.totalorder %s26, 0
      %p47 = por %p45, %p46
      %p48 = scmp.ne.s32.totalorder %s34, %s35
      %p49 = scmp.eq.s32.totalorder %s27, 1
      %p50 = por %p48, %p49
      %p52 = scmp.ne.s32.totalorder %s35, %s51
      %p53 = scmp.eq.s32.totalorder %s27, 0
      %p54 = por %p52, %p53
      %s56 = sadd.s32 %s55, 1
      %p59 = scmp.eq.s32.totalorder %s21, 1
      %p60 = scmp.ne.s32.totalorder %s55, %s57
      %p61 = scmp.eq.s32.totalorder %s21, 0
      %p62 = por %p60, %p61
      %p63 = scmp.ne.s32.totalorder %s55, %s57
      %p64 = scmp.eq.s32.totalorder %s26, 1
      %p65 = por %p63, %p64
      %p66 = scmp.ne.s32.totalorder %s57, %s58
      %p67 = scmp.eq.s32.totalorder %s26, 0
      %p68 = por %p66, %p67
      %p69 = scmp.ne.s32.totalorder %s57, %s58
      %p70 = scmp.eq.s32.totalorder %s27, 1
      %p71 = por %p69, %p70
      %p73 = scmp.ne.s32.totalorder %s58, %s72
      %p74 = scmp.eq.s32.totalorder %s27, 0
      %p75 = por %p73, %p74
      %s77 = sadd.s32 %s76, 1
      %p80 = scmp.eq.s32.totalorder %s21, 1
      %p81 = scmp.ne.s32.totalorder %s76, %s78
      %p82 = scmp.eq.s32.totalorder %s21, 0
      %p83 = por %p81, %p82
      %p84 = scmp.ne.s32.totalorder %s76, %s78
      %p85 = scmp.eq.s32.totalorder %s26, 1
      %p86 = por %p84, %p85
      %p87 = scmp.ne.s32.totalorder %s78, %s79
      %p88 = scmp.eq.s32.totalorder %s26, 0
      %p89 = por %p87, %p88
      %p90 = scmp.ne.s32.totalorder %s78, %s79
      %p91 = scmp.eq.s32.totalorder %s27, 1
      %p92 = por %p90, %p91
      %p94 = scmp.ne.s32.totalorder %s79, %s93
      %p95 = scmp.eq.s32.totalorder %s27, 0
      %p96 = por %p94, %p95
      %s98 = sadd.s32 %s97, 1
      %p101 = scmp.eq.s32.totalorder %s21, 1
      %p102 = scmp.ne.s32.totalorder %s97, %s99
      %p103 = scmp.eq.s32.totalorder %s21, 0
      %p104 = por %p102, %p103
      %p105 = scmp.ne.s32.totalorder %s97, %s99
      %p106 = scmp.eq.s32.totalorder %s26, 1
      %p107 = por %p105, %p106
      %p108 = scmp.ne.s32.totalorder %s99, %s100
      %p109 = scmp.eq.s32.totalorder %s26, 0
      %p110 = por %p108, %p109
      %p111 = scmp.ne.s32.totalorder %s99, %s100
      %p112 = scmp.eq.s32.totalorder %s27, 1
      %p113 = por %p111, %p112
      %p115 = scmp.ne.s32.totalorder %s100, %s114
      %p116 = scmp.eq.s32.totalorder %s27, 0
      %p117 = por %p115, %p116
      %s119 = sadd.s32 %s118, 1
      %p122 = scmp.eq.s32.totalorder %s21, 1
      %p123 = scmp.ne.s32.totalorder %s118, %s120
      %p124 = scmp.eq.s32.totalorder %s21, 0
      %p125 = por %p123, %p124
      %p126 = scmp.ne.s32.totalorder %s118, %s120
      %p127 = scmp.eq.s32.totalorder %s26, 1
      %p128 = por %p126, %p127
      %p129 = scmp.ne.s32.totalorder %s120, %s121
      %p130 = scmp.eq.s32.totalorder %s26, 0
      %p131 = por %p129, %p130
      %p132 = scmp.ne.s32.totalorder %s120, %s121
      %p133 = scmp.eq.s32.totalorder %s27, 1
      %p134 = por %p132, %p133
      %p136 = scmp.ne.s32.totalorder %s121, %s135
      %p137 = scmp.eq.s32.totalorder %s27, 0
      %p138 = por %p136, %p137
      %s140 = sadd.s32 %s139, 1
      %p143 = scmp.eq.s32.totalorder %s21, 1
      %p144 = scmp.ne.s32.totalorder %s139, %s141
      %p145 = scmp.eq.s32.totalorder %s21, 0
      %p146 = por %p144, %p145
      %p147 = scmp.ne.s32.totalorder %s139, %s141
      %p148 = scmp.eq.s32.totalorder %s26, 1
      %p149 = por %p147, %p148
      %p150 = scmp.ne.s32.totalorder %s141, %s142
      %p151 = scmp.eq.s32.totalorder %s26, 0
      %p152 = por %p150, %p151
      %p153 = scmp.ne.s32.totalorder %s141, %s142
      %p154 = scmp.eq.s32.totalorder %s27, 1
      %p155 = por %p153, %p154
      %p157 = scmp.ne.s32.totalorder %s142, %s156
      %p158 = scmp.eq.s32.totalorder %s27, 0
      %p159 = por %p157, %p158
      %s161 = sadd.s32 %s160, 1
      %p164 = scmp.eq.s32.totalorder %s21, 1
      %p165 = scmp.ne.s32.totalorder %s160, %s162
      %p166 = scmp.eq.s32.totalorder %s21, 0
      %p167 = por %p165, %p166
      %p168 = scmp.ne.s32.totalorder %s160, %s162
      %p169 = scmp.eq.s32.totalorder %s26, 1
      %p170 = por %p168, %p169
      %p171 = scmp.ne.s32.totalorder %s162, %s163
      %p172 = scmp.eq.s32.totalorder %s26, 0
      %p173 = por %p171, %p172
      %p174 = scmp.ne.s32.totalorder %s162, %s163
      %p175 = scmp.eq.s32.totalorder %s27, 1
      %p176 = por %p174, %p175
      %p178 = scmp.ne.s32.totalorder %s163, %s177
      %p179 = scmp.eq.s32.totalorder %s27, 0
      %p180 = por %p178, %p179
      %s182 = sadd.s32 %s181, 1
      %p185 = scmp.eq.s32.totalorder %s21, 1
      %p186 = scmp.ne.s32.totalorder %s181, %s183
      %p187 = scmp.eq.s32.totalorder %s21, 0
      %p188 = por %p186, %p187
      %p189 = scmp.ne.s32.totalorder %s181, %s183
      %p190 = scmp.eq.s32.totalorder %s26, 1
      %p191 = por %p189, %p190
      %p192 = scmp.ne.s32.totalorder %s183, %s184
      %p193 = scmp.eq.s32.totalorder %s26, 0
      %p194 = por %p192, %p193
      %p195 = scmp.ne.s32.totalorder %s183, %s184
      %p196 = scmp.eq.s32.totalorder %s27, 1
      %p197 = por %p195, %p196
      %p199 = scmp.ne.s32.totalorder %s184, %s198
      %p200 = scmp.eq.s32.totalorder %s27, 0
      %p201 = por %p199, %p200
      %s203 = sadd.s32 %s202, 1
      %p206 = scmp.eq.s32.totalorder %s21, 1
      %p207 = scmp.ne.s32.totalorder %s202, %s204
      %p208 = scmp.eq.s32.totalorder %s21, 0
      %p209 = por %p207, %p208
      %p210 = scmp.ne.s32.totalorder %s202, %s204
      %p211 = scmp.eq.s32.totalorder %s26, 1
      %p212 = por %p210, %p211
      %p213 = scmp.ne.s32.totalorder %s204, %s205
      %p214 = scmp.eq.s32.totalorder %s26, 0
      %p215 = por %p213, %p214
      %p216 = scmp.ne.s32.totalorder %s204, %s205
      %p217 = scmp.eq.s32.totalorder %s27, 1
      %p218 = por %p216, %p217
      %p220 = scmp.ne.s32.totalorder %s205, %s219
      %p221 = scmp.eq.s32.totalorder %s27, 0
      %p222 = por %p220, %p221
      %s224 = sadd.s32 %s223, 1
      %p227 = scmp.eq.s32.totalorder %s21, 1
      %p228 = scmp.ne.s32.totalorder %s223, %s225
      %p229 = scmp.eq.s32.totalorder %s21, 0
      %p230 = por %p228, %p229
      %p231 = scmp.ne.s32.totalorder %s223, %s225
      %p232 = scmp.eq.s32.totalorder %s26, 1
      %p233 = por %p231, %p232
      %p234 = scmp.ne.s32.totalorder %s225, %s226
      %p235 = scmp.eq.s32.totalorder %s26, 0
      %p236 = por %p234, %p235
      %p237 = scmp.ne.s32.totalorder %s225, %s226
      %p238 = scmp.eq.s32.totalorder %s27, 1
      %p239 = por %p237, %p238
      %p241 = scmp.ne.s32.totalorder %s226, %s240
      %p242 = scmp.eq.s32.totalorder %s27, 0
      %p243 = por %p241, %p242
      %s244 = ssub.s32 %s21, %s28
      %p245 = scmp.eq.s32.totalorder %s244, 0
      %s247 = sadd.s32 %s246, 1
      %s248 = scalar_select %p245, %s246, %s247
      %p251 = pneg %p245
      %p252 = scmp.eq.s32.totalorder %s21, 1
      %p253 = por %p251, %p252
      %p254 = scmp.ne.s32.totalorder %s246, %s249
      %p255 = scmp.eq.s32.totalorder %s21, 0
      %p256 = por %p254, %p255
      %p257 = scmp.ne.s32.totalorder %s246, %s249
      %p258 = scmp.eq.s32.totalorder %s26, 1
      %p259 = por %p257, %p258
      %p260 = scmp.ne.s32.totalorder %s249, %s250
      %p261 = scmp.eq.s32.totalorder %s26, 0
      %p262 = por %p260, %p261
      %p263 = scmp.ne.s32.totalorder %s249, %s250
      %p264 = scmp.eq.s32.totalorder %s27, 1
      %p265 = por %p263, %p264
      %p267 = scmp.ne.s32.totalorder %s250, %s266
      %p268 = scmp.eq.s32.totalorder %s27, 0
      %p269 = por %p267, %p268
      %p270 = scmp.le.s32.totalorder 1, %s21
      %p271 = scmp.lt.s32.totalorder %s21, 3
      %p272 = pnand %p270, %p271
      %p273 = pneg %p272
      // Predicated region
      $region9: #{tpu_custom_call.1} parent=5 // pred_check
        _
      $region10: #{tpu_custom_call.1} parent=5 // pred_check_branch
        %275 = sbr.rel (%p272) target = $region12
      $region11: #{tpu_custom_call.1} parent=5 // pred_region
        %s276 = ssub.s32 %s21, 1
        // Predicated region
        $region13: #{tpu_custom_call.1} parent=11 // pred_check
          %p277 = pneg %p68
        $region14: #{tpu_custom_call.1} parent=11 // pred_check_branch
          %279 = sbr.rel (%p277) target = $region16
        $region15: #{tpu_custom_call.1} parent=11 // pred_region
          %281 = vsyncadd [#allocation3], 0
          %s282 = sshll.u32 %s1, 4
          %s283 = int_to_ptr.hbm [resolvable:$true] %s282
          %s284 = sshll.u32 [#allocation2], 4
          %s285 = int_to_ptr.vmem [resolvable:$true] %s284
          %290 = dma.hbm_to_vmem [thread:$0]  %s283, 256, %s285, [#allocation3], 64, 64, 4
        $region16: #{tpu_custom_call.1} parent=11 // pred_fallthru
          _
        // Predicated region
        $region17: #{tpu_custom_call.1} parent=11 // pred_check
          %p291 = pneg %p89
        $region18: #{tpu_custom_call.1} parent=11 // pred_check_branch
          %293 = sbr.rel (%p291) target = $region20
        $region19: #{tpu_custom_call.1} parent=11 // pred_region
          _
        $region20: #{tpu_custom_call.1} parent=11 // pred_fallthru
          _
        // Predicated region
        $region21: #{tpu_custom_call.1} parent=11 // pred_check
          %p294 = pneg %p110
        $region22: #{tpu_custom_call.1} parent=11 // pred_check_branch
          %296 = sbr.rel (%p294) target = $region24
        $region23: #{tpu_custom_call.1} parent=11 // pred_region
          _
        $region24: #{tpu_custom_call.1} parent=11 // pred_fallthru
          _
        // Predicated region
        $region25: #{tpu_custom_call.1} parent=11 // pred_check
          %p297 = pneg %p131
        $region26: #{tpu_custom_call.1} parent=11 // pred_check_branch
          %299 = sbr.rel (%p297) target = $region28
        $region27: #{tpu_custom_call.1} parent=11 // pred_region
          _
        $region28: #{tpu_custom_call.1} parent=11 // pred_fallthru
          _
        // Predicated region
        $region29: #{tpu_custom_call.1} parent=11 // pred_check
          %p300 = pneg %p152
        $region30: #{tpu_custom_call.1} parent=11 // pred_check_branch
          %302 = sbr.rel (%p300) target = $region32
        $region31: #{tpu_custom_call.1} parent=11 // pred_region
          %304 = vsyncadd [#allocation6], 0
          %s305 = sshll.u32 %s5, 4
          %s306 = int_to_ptr.hbm [resolvable:$true] %s305
          %s307 = sshll.u32 [#allocation5], 4
          %s308 = int_to_ptr.vmem [resolvable:$true] %s307
          %313 = dma.hbm_to_vmem [thread:$0]  %s306, 512, %s308, [#allocation6], 64, 64, 4
        $region32: #{tpu_custom_call.1} parent=11 // pred_fallthru
          _
        // Predicated region
        $region33: #{tpu_custom_call.1} parent=11 // pred_check
          %p314 = pneg %p173
        $region34: #{tpu_custom_call.1} parent=11 // pred_check_branch
          %316 = sbr.rel (%p314) target = $region36
        $region35: #{tpu_custom_call.1} parent=11 // pred_region
          _
        $region36: #{tpu_custom_call.1} parent=11 // pred_fallthru
          _
        // Predicated region
        $region37: #{tpu_custom_call.1} parent=11 // pred_check
          %p317 = pneg %p194
        $region38: #{tpu_custom_call.1} parent=11 // pred_check_branch
          %319 = sbr.rel (%p317) target = $region40
        $region39: #{tpu_custom_call.1} parent=11 // pred_region
          _
        $region40: #{tpu_custom_call.1} parent=11 // pred_fallthru
          _
        // Predicated region
        $region41: #{tpu_custom_call.1} parent=11 // pred_check
          %p320 = pneg %p215
        $region42: #{tpu_custom_call.1} parent=11 // pred_check_branch
          %322 = sbr.rel (%p320) target = $region44
        $region43: #{tpu_custom_call.1} parent=11 // pred_region
          _
        $region44: #{tpu_custom_call.1} parent=11 // pred_fallthru
          _
        // Predicated region
        $region45: #{tpu_custom_call.1} parent=11 // pred_check
          %p323 = pneg %p236
        $region46: #{tpu_custom_call.1} parent=11 // pred_check_branch
          %325 = sbr.rel (%p323) target = $region48
        $region47: #{tpu_custom_call.1} parent=11 // pred_region
          _
        $region48: #{tpu_custom_call.1} parent=11 // pred_fallthru
          _
      $region12: #{tpu_custom_call.1} parent=5 // pred_fallthru
        _
      %p326 = scmp.lt.s32.totalorder %s21, 2
      // Predicated region
      $region49: #{tpu_custom_call.1} parent=5 // pred_check
        %p327 = pneg %p326
      $region50: #{tpu_custom_call.1} parent=5 // pred_check_branch
        %329 = sbr.rel (%p327) target = $region52
      $region51: #{tpu_custom_call.1} parent=5 // pred_region
        // Predicated region
        $region53: #{tpu_custom_call.1} parent=51 // pred_check
          %p330 = pneg %p41
        $region54: #{tpu_custom_call.1} parent=51 // pred_check_branch
          %332 = sbr.rel (%p330) target = $region56
        $region55: #{tpu_custom_call.1} parent=51 // pred_region
          %p333 = scmp.lt.s32.totalorder %s21, 1
          %s334 = scalar_select %p333, %s21, 1
          %s335 = smul.addr %s334, 8
          %s336 = scalar_lea.vmem %s0, %s335
        $region56: #{tpu_custom_call.1} parent=51 // pred_fallthru
          _
      $region52: #{tpu_custom_call.1} parent=5 // pred_fallthru
        _
      %p337 = scmp.le.s32.totalorder 1, %s21
      %p338 = scmp.lt.s32.totalorder %s21, 3
      %p339 = pnand %p337, %p338
      %p340 = pneg %p339
      // Predicated region
      $region57: #{tpu_custom_call.1} parent=5 // pred_check
        _
      $region58: #{tpu_custom_call.1} parent=5 // pred_check_branch
        %342 = sbr.rel (%p339) target = $region60
      $region59: #{tpu_custom_call.1} parent=5 // pred_region
        %s343 = ssub.s32 %s21, 1
        // Predicated region
        $region61: #{tpu_custom_call.1} parent=59 // pred_check
          %p344 = pneg %p68
        $region62: #{tpu_custom_call.1} parent=59 // pred_check_branch
          %346 = sbr.rel (%p344) target = $region64
        $region63: #{tpu_custom_call.1} parent=59 // pred_region
          %348 = dma.done [#allocation3], 256
        $region64: #{tpu_custom_call.1} parent=59 // pred_fallthru
          _
        // Predicated region
        $region65: #{tpu_custom_call.1} parent=59 // pred_check
          %p349 = pneg %p152
        $region66: #{tpu_custom_call.1} parent=59 // pred_check_branch
          %351 = sbr.rel (%p349) target = $region68
        $region67: #{tpu_custom_call.1} parent=59 // pred_region
          %353 = dma.done [#allocation6], 512
        $region68: #{tpu_custom_call.1} parent=59 // pred_fallthru
          _
        %p354 = scmp.lt.s32.totalorder %s26, 1
        %s355 = scalar_select %p354, %s26, 1
        %s356 = smul.addr %s355, 8
        %s357 = scalar_lea.vmem %s0, %s356
        %p358 = pneg %p47
        %p359 = pneg %p44
        %p360 = pneg %p68
        %p361 = pneg %p65
        %p362 = pneg %p89
        %p363 = pneg %p86
        %p364 = pneg %p110
        %p365 = pneg %p107
        %p366 = pneg %p131
        %p367 = pneg %p128
        %p368 = pneg %p152
        %p369 = pneg %p149
        %p370 = pneg %p173
        %p371 = pneg %p170
        %p372 = pneg %p194
        %p373 = pneg %p191
        %p374 = pneg %p215
        %p375 = pneg %p212
        %p376 = pneg %p236
        %p377 = pneg %p233
        %p378 = pneg %p262
        %p379 = pneg %p259
        %s380 = sand.u32 %s249, 1
        %s381 = scalar_lea.sflag [#allocation4], %s380
        %s382 = sand.u32 %s249, 1
        %s383 = smul.addr %s382, 8
        %s384 = scalar_lea.vmem [#allocation7], %s383
        %p385 = scmp.lt.s32.totalorder %s26, 1
        %s386 = scalar_select %p385, %s26, 1
        %s387 = smul.addr %s386, 8
        %s388 = scalar_lea.vmem %s0, %s387
        %v390 = vld [vmem:[%s388] sm:$0xff]
        %v391 = vpack.c.bf16 %v390, %v390
        %v392 = vld [vmem:[#allocation2] sm:$0xf]
        %v393 = vld [vmem:[#allocation2 + $0x4] sm:$0xf]
        %v394 = vld [vmem:[#allocation2 + $0x8] sm:$0xf]
        %v395 = vld [vmem:[#allocation2 + $0xc] sm:$0xf]
        %v396 = vld [vmem:[%s2] sm:$0x1]
        %v398 = vperm.slane %v396, 0
        %v404 = vunpack.c.l.b16 %v392
        %v405 = vunpack.c.l.b16 %v393
        %v406 = vunpack.c.l.b16 %v394
        %v407 = vunpack.c.l.b16 %v395
        %v408 = vpack.c.b16 %v405, %v404
        %v409 = vpack.c.b16 %v407, %v406
        %vm412 = vcmask 261120
        %v414 = vsel %vm412, %v391, 0
        %416 = vmatpush.bf16.msra.mxu0 0
        %417 = vmatpush.bf16.msra.mxu0 0
        %418 = vmatpush.bf16.msra.mxu0 0
        %419 = vmatpush.bf16.msra.mxu0 0
        %420 = vmatpush.bf16.msra.mxu0 0
        %421 = vmatpush.bf16.msra.mxu0 0
        %422 = vmatpush.bf16.msra.mxu0 %v409
        %423 = vmatpush.bf16.msra.mxu0 %v408
        %424 = vmatmul.bf16.gmra.mxu0 %v414
        %v425 = vpop.f32.mrf.mxu0
        %v426 = vadd.f32 %v398, %v425
        %v427 = vpop.f32.mrf.mxu0
        %428 = vdwg.mxu0
        %v429 = vpack.c.bf16 %v426, %v426
        %v430 = vld [vmem:[%s3] sm:$0xf]
        %v431 = vld [vmem:[%s3 + $0x4] sm:$0xf]
        %v432 = vld [vmem:[%s3 + $0x8] sm:$0xf]
        %v433 = vld [vmem:[%s3 + $0xc] sm:$0xf]
        %v434 = vld [vmem:[%s3 + $0x10] sm:$0xf]
        %v435 = vld [vmem:[%s3 + $0x14] sm:$0xf]
        %v436 = vld [vmem:[%s3 + $0x18] sm:$0xf]
        %v437 = vld [vmem:[%s3 + $0x1c] sm:$0xf]
        %v438 = vld [vmem:[%s4] sm:$0x1]
        %v440 = vperm.slane %v438, 0
        %v450 = vunpack.c.l.b16 %v430
        %v451 = vunpack.c.l.b16 %v431
        %v452 = vunpack.c.l.b16 %v432
        %v453 = vunpack.c.l.b16 %v433
        %v454 = vunpack.c.l.b16 %v434
        %v455 = vunpack.c.l.b16 %v435
        %v456 = vunpack.c.l.b16 %v436
        %v457 = vunpack.c.l.b16 %v437
        %v458 = vpack.c.b16 %v451, %v450
        %v459 = vpack.c.b16 %v453, %v452
        %v460 = vpack.c.b16 %v455, %v454
        %v461 = vpack.c.b16 %v457, %v456
        %vm466 = vcmask 523264
        %v468 = vsel %vm466, %v429, 0
        %470 = vmatpush.bf16.msra.mxu0 0
        %471 = vmatpush.bf16.msra.mxu0 0
        %472 = vmatpush.bf16.msra.mxu0 0
        %473 = vmatpush.bf16.msra.mxu0 0
        %474 = vmatpush.bf16.msra.mxu0 %v461
        %475 = vmatpush.bf16.msra.mxu0 %v460
        %476 = vmatpush.bf16.msra.mxu0 %v459
        %477 = vmatpush.bf16.msra.mxu0 %v458
        %478 = vmatmul.bf16.gmra.mxu0 %v468
        %v479 = vpop.f32.mrf.mxu0
        %v480 = vadd.f32 %v440, %v479
        %v481 = vpop.f32.mrf.mxu0
        %482 = vdwg.mxu0
        %v483 = vld [vmem:[#allocation5] sm:$0xf]
        %v484 = vld [vmem:[#allocation5 + $0x4] sm:$0xf]
        %v485 = vld [vmem:[#allocation5 + $0x8] sm:$0xf]
        %v486 = vld [vmem:[#allocation5 + $0xc] sm:$0xf]
        %v487 = vld [vmem:[#allocation5 + $0x10] sm:$0xf]
        %v488 = vld [vmem:[#allocation5 + $0x14] sm:$0xf]
        %v489 = vld [vmem:[#allocation5 + $0x18] sm:$0xf]
        %v490 = vld [vmem:[#allocation5 + $0x1c] sm:$0xf]
        %v491 = vld [vmem:[%s6] sm:$0x1]
        %v493 = vperm.slane %v491, 0
        %v503 = vunpack.c.l.b16 %v483
        %v504 = vunpack.c.l.b16 %v484
        %v505 = vunpack.c.l.b16 %v485
        %v506 = vunpack.c.l.b16 %v486
        %v507 = vunpack.c.l.b16 %v487
        %v508 = vunpack.c.l.b16 %v488
        %v509 = vunpack.c.l.b16 %v489
        %v510 = vunpack.c.l.b16 %v490
        %v511 = vpack.c.b16 %v504, %v503
        %v512 = vpack.c.b16 %v506, %v505
        %v513 = vpack.c.b16 %v508, %v507
        %v514 = vpack.c.b16 %v510, %v509
        %519 = vmatpush.bf16.msra.mxu0 0
        %520 = vmatpush.bf16.msra.mxu0 0
        %521 = vmatpush.bf16.msra.mxu0 0
        %522 = vmatpush.bf16.msra.mxu0 0
        %523 = vmatpush.bf16.msra.mxu0 %v514
        %524 = vmatpush.bf16.msra.mxu0 %v513
        %525 = vmatpush.bf16.msra.mxu0 %v512
        %526 = vmatpush.bf16.msra.mxu0 %v511
        %527 = vmatmul.bf16.gmra.mxu0 %v468
        %v528 = vpop.f32.mrf.mxu0
        %v529 = vadd.f32 %v493, %v528
        %v530 = vpop.f32.mrf.mxu0
        %531 = vdwg.mxu0
        %v532 = vxor.u32 %v529, 2147483648
        %v533 = vmul.f32 %v532, 1.442695
        %v534 = vpow.pop %v533
        %v535 = vadd.f32 %v534, 1.0
        %v536 = vrcp.pop %v535
        %v537 = vmul.f32 %v535, %v536
        %v538 = vsub.f32 1.0, %v537
        %v539 = vmul.f32 %v536, %v538
        %v540 = vadd.f32 %v536, %v539
        %vm541 = vweird.f32 %v535
        %vm542 = vweird.f32 %v536
        %vm543 = vmor %vm541, %vm542
        %v544 = vsel %vm543, %v536, %v540
        %v545 = vand.u32 2147483647, %v535
        %vm546 = vcmp.eq.f32.partialorder %v545, 8.507059e+37
        %v547 = vand.u32 %v535, 2147483648
        %v548 = vor.u32 1.1754944e-38, %v547
        %v549 = vsel %vm546, %v548, %v544
        %v550 = vmul.f32 1.0, %v549
        %v551 = vmul.f32 %v529, %v550
        %v552 = vmul.f32 %v480, %v551
        %v553 = vpack.c.bf16 %v552, %v552
        %v554 = vld [vmem:[%s7] sm:$0xf]
        %v555 = vld [vmem:[%s7 + $0x4] sm:$0xf]
        %v556 = vld [vmem:[%s7 + $0x8] sm:$0xf]
        %v557 = vld [vmem:[%s7 + $0xc] sm:$0xf]
        %v558 = vld [vmem:[%s7 + $0x10] sm:$0xf]
        %v559 = vld [vmem:[%s7 + $0x14] sm:$0xf]
        %v560 = vld [vmem:[%s7 + $0x18] sm:$0xf]
        %v561 = vld [vmem:[%s7 + $0x1c] sm:$0xf]
        %v562 = vld [vmem:[%s8] sm:$0x1]
        %v564 = vperm.slane %v562, 0
        %v574 = vunpack.c.l.b16 %v554
        %v575 = vunpack.c.l.b16 %v555
        %v576 = vunpack.c.l.b16 %v556
        %v577 = vunpack.c.l.b16 %v557
        %v578 = vunpack.c.l.b16 %v558
        %v579 = vunpack.c.l.b16 %v559
        %v580 = vunpack.c.l.b16 %v560
        %v581 = vunpack.c.l.b16 %v561
        %v582 = vpack.c.b16 %v575, %v574
        %v583 = vpack.c.b16 %v577, %v576
        %v584 = vpack.c.b16 %v579, %v578
        %v585 = vpack.c.b16 %v581, %v580
        %v591 = vsel %vm466, %v553, 0
        %593 = vmatpush.bf16.msra.mxu0 0
        %594 = vmatpush.bf16.msra.mxu0 0
        %595 = vmatpush.bf16.msra.mxu0 0
        %596 = vmatpush.bf16.msra.mxu0 0
        %597 = vmatpush.bf16.msra.mxu0 %v585
        %598 = vmatpush.bf16.msra.mxu0 %v584
        %599 = vmatpush.bf16.msra.mxu0 %v583
        %600 = vmatpush.bf16.msra.mxu0 %v582
        %601 = vmatmul.bf16.gmra.mxu0 %v591
        %v602 = vpop.f32.mrf.mxu0
        %v603 = vadd.f32 %v564, %v602
        %v604 = vpop.f32.mrf.mxu0
        %605 = vdwg.mxu0
        %v606 = vadd.f32 %v603, %v390
        %v607 = vmul.f32 %v606, %v606
        %v608 = vsel %vm412, %v607, 0.0
        %609 = vadd.xlane.f32.xlu0 %v608
        %v610 = vpop.xlane.xlu0 %609
        %v611 = vrcp.pop 32.0
        %v612 = vmul.f32 32.0, %v611
        %v613 = vsub.f32 1.0, %v612
        %v614 = vmul.f32 %v611, %v613
        %v615 = vadd.f32 %v611, %v614
        %vm616 = vweird.f32 %v611
        %v617 = vsel %vm616, %v611, %v615
        %v618 = vmul.f32 %v610, %v617
        %v619 = vadd.f32 %v618, 1e-06
        %v620 = vrsqrt.pop %v619
        %v621 = vmul.f32 %v620, %v619
        %v622 = vmul.f32 %v621, %v620
        %v623 = vmul.f32 0.5, %v622
        %v624 = vsub.f32 1.5, %v623
        %v625 = vmul.f32 %v620, %v624
        %vm626 = vweird.f32 %v619
        %vm627 = vweird.f32 %v620
        %vm628 = vmor %vm626, %vm627
        %v629 = vsel %vm628, %v620, %v625
        %v630 = vmul.f32 %v606, %v629
        %v631 = vld [vmem:[%s9] sm:$0x1]
        %v633 = vperm.slane %v631, 0
        %v635 = vmul.f32 %v630, %v633
        %636 = vst.msk [vmem:[%s384] sm:$0xff] %vm412, %v635
        %s637 = sand.u32 %s249, 1
        %s638 = scalar_lea.sflag [#allocation4], %s637
        %s639 = sand.u32 %s249, 1
        %s640 = smul.addr %s639, 8
        %s641 = scalar_lea.vmem [#allocation7], %s640
        // Predicated region
        $region69: #{tpu_custom_call.1} parent=59 // pred_check
          %p642 = pneg %p259
        $region70: #{tpu_custom_call.1} parent=59 // pred_check_branch
          %644 = sbr.rel (%p642) target = $region72
        $region71: #{tpu_custom_call.1} parent=59 // pred_region
          %646 = vsyncadd %s638, 0
          %s647 = smul.addr %s26, 8
          %s648 = scalar_lea.hbm %s10, %s647
          %s650 = sshll.u32 %s641, 4
          %s651 = int_to_ptr.vmem [resolvable:$true] %s650
          %s652 = sshll.u32 %s648, 4
          %s653 = int_to_ptr.hbm [resolvable:$true] %s652
          %655 = dma.vmem_to_hbm [thread:$0]  %s651, 128, %s653, %s638
        $region72: #{tpu_custom_call.1} parent=59 // pred_fallthru
          _
      $region60: #{tpu_custom_call.1} parent=5 // pred_fallthru
        _
      %p656 = scmp.le.s32.totalorder 2, %s21
      // Predicated region
      $region73: #{tpu_custom_call.1} parent=5 // pred_check
        %p657 = pneg %p656
      $region74: #{tpu_custom_call.1} parent=5 // pred_check_branch
        %659 = sbr.rel (%p657) target = $region76
      $region75: #{tpu_custom_call.1} parent=5 // pred_region
        %s660 = ssub.s32 %s21, 2
        // Predicated region
        $region77: #{tpu_custom_call.1} parent=75 // pred_check
          %p661 = pneg %p265
        $region78: #{tpu_custom_call.1} parent=75 // pred_check_branch
          %663 = sbr.rel (%p661) target = $region80
        $region79: #{tpu_custom_call.1} parent=75 // pred_region
          %s664 = sand.u32 %s250, 1
          %s665 = scalar_lea.sflag [#allocation4], %s664
          %s666 = sand.u32 %s250, 1
          %s667 = smul.addr %s666, 8
          %s668 = scalar_lea.vmem [#allocation7], %s667
          %670 = dma.done %s665, 128
        $region80: #{tpu_custom_call.1} parent=75 // pred_fallthru
          _
      $region76: #{tpu_custom_call.1} parent=5 // pred_fallthru
        _
    $region6: #{tpu_custom_call.1} parent=1 // loop_footer
      %s25 = sadd.s32 1, %s21
    $region7: #{tpu_custom_call.1} parent=1 // loop_footer_branch
      %20 = sbr.rel target = $region3
    $region8: #{tpu_custom_call.1} parent=1 // loop_exit
      _
    %671 = vsyncpa [#allocation3], 1
    %s672 = scalar_lea.sflag [#allocation3], 1
    %673 = vsyncpa %s672, 1
    %674 = vsyncpa [#allocation6], 1
    %675 = vsyncpa [#allocation4], 1
    %s676 = scalar_lea.sflag [#allocation4], 1
    %677 = vsyncpa %s676, 1

</llo_original>
